<compile_context>
chip_gen: v6e
topology: v6e:2x2x1
jax: 0.10.0
libtpu: 0.0.40
codegen_flags: <defaults>
</compile_context>

<pallas_src>
import functools

import jax
import jax.numpy as jnp
from jax.experimental import pallas as pl
from jax.experimental.pallas import tpu as pltpu


def _round_up(a, b):
    return ((a + b - 1) // b) * b


def _maxout_linear_kernel(x_ref, w_ref, b_ref, o_ref, *, d_out_p, pool):
    x = x_ref[...]  # (tm, d_in) bf16
    # Running max over pool chunks: only one (tm, d_out_p) f32 value stays
    # live.  Each chunk slice is lane-aligned (d_out_p is a multiple of 128)
    # so slicing w_ref / b_ref is a free static view.
    m = jnp.dot(x, w_ref[:, 0:d_out_p],
                preferred_element_type=jnp.float32) + b_ref[:, 0:d_out_p]
    for p in range(1, pool):
        z = jnp.dot(x, w_ref[:, p * d_out_p:(p + 1) * d_out_p],
                    preferred_element_type=jnp.float32)
        z = z + b_ref[:, p * d_out_p:(p + 1) * d_out_p]
        m = jnp.maximum(m, z)
    o_ref[...] = m.astype(o_ref.dtype)


def prepare_maxout_params(w_pt, b_pt, d_out, pool):
    """One-time rearrangement of the PyTorch Linear parameters.

    w_pt: (d_out*pool, d_in) with row index r = d*pool + p (PyTorch view order).
    Returns:
      wk: (d_in, pool*d_out_p) bfloat16, column index = p*d_out_p + d
      bk: (1, pool*d_out_p) float32
      d_out_p: d_out padded up to a multiple of 128 lanes
    Padded columns are zero; they only compete with other padded columns in the
    elementwise max and are sliced off after the kernel.
    """
    d_in = w_pt.shape[-1]
    d_out_p = _round_up(d_out, 128)
    w3 = w_pt.reshape(d_out, pool, d_in)
    w3 = jnp.transpose(w3, (1, 0, 2))                       # (pool, d_out, d_in)
    w3 = jnp.pad(w3, ((0, 0), (0, d_out_p - d_out), (0, 0)))
    wk = w3.reshape(pool * d_out_p, d_in).T.astype(jnp.bfloat16)
    b2 = b_pt.reshape(d_out, pool).T                        # (pool, d_out)
    b2 = jnp.pad(b2, ((0, 0), (0, d_out_p - d_out)))
    bk = b2.reshape(1, pool * d_out_p).astype(jnp.float32)
    return wk, bk, d_out_p


def maxout_linear(x, wk, bk, d_out, d_out_p, pool, *, tm=512):
    """x: (..., d_in); wk/bk from prepare_maxout_params. Returns (..., d_out)."""
    d_in = x.shape[-1]
    lead = x.shape[:-1]
    M = 1
    for s in lead:
        M *= s

    x2d = x.reshape(M, d_in).astype(jnp.bfloat16)

    # Tile size: multiple of 16 (bf16 sublane pack); full-M block if M is small.
    tm_eff = tm if M >= tm else _round_up(max(M, 1), 16)
    M_pad = _round_up(M, tm_eff)
    if M_pad != M:
        x2d = jnp.pad(x2d, ((0, M_pad - M), (0, 0)))

    C = pool * d_out_p
    grid = (M_pad // tm_eff,)

    # VMEM budget: double-buffered x/out tiles + (conservatively 2x) resident
    # weight and bias + the f32 running-max accumulator. Cap at v7x's 64 MiB.
    vmem_need = (2 * tm_eff * d_in * 2      # x tiles (bf16)
                 + 2 * d_in * C * 2         # weight (bf16)
                 + 2 * C * 4                # bias (f32)
                 + 2 * tm_eff * d_out_p * 4 # out tiles (f32)
                 + tm_eff * d_out_p * 4)    # accumulator temp
    vmem_limit = int(min(64 * 1024 * 1024,
                         max(2 * vmem_need, 16 * 1024 * 1024)))

    kernel = functools.partial(_maxout_linear_kernel, d_out_p=d_out_p, pool=pool)

    cost = pl.CostEstimate(
        flops=2 * M_pad * d_in * C,
        transcendentals=0,
        bytes_accessed=M_pad * d_in * 2 + d_in * C * 2 + C * 4
        + M_pad * d_out_p * 4,
    )

    out2d = pl.pallas_call(
        kernel,
        out_shape=jax.ShapeDtypeStruct((M_pad, d_out_p), x.dtype),
        grid_spec=pltpu.PrefetchScalarGridSpec(
            num_scalar_prefetch=0,
            grid=grid,
            in_specs=[
                pl.BlockSpec((tm_eff, d_in), lambda i: (i, 0)),   # x tile
                pl.BlockSpec((d_in, C), lambda i: (0, 0)),        # weight, resident
                pl.BlockSpec((1, C), lambda i: (0, 0)),           # bias, resident
            ],
            out_specs=pl.BlockSpec((tm_eff, d_out_p), lambda i: (i, 0)),
        ),
        compiler_params=pltpu.CompilerParams(
            dimension_semantics=("parallel",),  # v7x: shard M tiles across 2 TCs
            vmem_limit_bytes=vmem_limit,
        ),
        cost_estimate=cost,
    )(x2d, wk, bk)

    return out2d[:M, :d_out].reshape(*lead, d_out)


def _reference(x, w_pt, b_pt, d_out, pool):
    out = jnp.einsum("...i,oi->...o", x, w_pt) + b_pt
    out = out.reshape(*out.shape[:-1], d_out, pool)
    return out.max(axis=-1)


if __name__ == "__main__":
    # Small shapes consistent with the module's forward.
    batch, seq, d_in, d_out, pool = 2, 8, 32, 16, 4

    key = jax.random.PRNGKey(0)
    kx, kw, kb = jax.random.split(key, 3)

    x = jax.random.normal(kx, (batch, seq, d_in), dtype=jnp.float32)

    # Deterministic Linear init (PyTorch default: U(-1/sqrt(d_in), 1/sqrt(d_in))).
    bound = 1.0 / (d_in ** 0.5)
    w_pt = jax.random.uniform(kw, (d_out * pool, d_in), jnp.float32, -bound, bound)
    b_pt = jax.random.uniform(kb, (d_out * pool,), jnp.float32, -bound, bound)

    # Parameter rearrangement hoisted out of the per-call path.
    wk, bk, d_out_p = prepare_maxout_params(w_pt, b_pt, d_out, pool)

    out = maxout_linear(x, wk, bk, d_out, d_out_p, pool)
    out = jax.block_until_ready(out)

    ref = _reference(x, w_pt, b_pt, d_out, pool)
    assert out.shape == (batch, seq, d_out)
    # bf16 MXU inputs with f32 accumulation -> compare with a bf16-level tolerance.
    assert jnp.allclose(out, ref, atol=3e-2, rtol=3e-2), (
        float(jnp.max(jnp.abs(out - ref))))

    print("KERNEL_OK")
</pallas_src>

<mosaic_0001>
module attributes {stable_mosaic.version = 11 : i64} {
  func.func @_maxout_linear_kernel(%arg0: i32, %arg1: memref<16x32xbf16, #tpu.memory_space<vmem>>, %arg2: memref<32x512xbf16, #tpu.memory_space<vmem>>, %arg3: memref<1x512xf32, #tpu.memory_space<vmem>>, %arg4: memref<16x128xf32, #tpu.memory_space<vmem>>) attributes {dimension_semantics = [#tpu.dimension_semantics<parallel>], iteration_bounds = array<i64: 1>, scalar_prefetch = 0 : i64, scratch_operands = 0 : i64, tpu.core_type = #tpu.core_type<tc>, window_params = [{transform_indices = @transform_0, window_bounds = array<i64: 16, 32>}, {pipeline_mode = #tpu.pipeline_mode<synchronous>, transform_indices = @transform_1, window_bounds = array<i64: 32, 512>}, {pipeline_mode = #tpu.pipeline_mode<synchronous>, transform_indices = @transform_2, window_bounds = array<i64: 1, 512>}, {transform_indices = @transform_3, window_bounds = array<i64: 16, 128>}]} {
    %c0 = arith.constant 0 : index
    %c0_0 = arith.constant 0 : index
    %0 = vector.load %arg1[%c0, %c0_0] : memref<16x32xbf16, #tpu.memory_space<vmem>>, vector<16x32xbf16>
    %c0_1 = arith.constant 0 : index
    %c0_2 = arith.constant 0 : index
    %1 = vector.load %arg2[%c0_1, %c0_2] : memref<32x512xbf16, #tpu.memory_space<vmem>>, vector<32x128xbf16>
    %cst = arith.constant dense<0.000000e+00> : vector<16x128xf32>
    %2 = tpu.matmul %0, %1, %cst {dimension_numbers = #tpu.dot_dimension_numbers<[1], [0], [0], [1], [0, 0, 1, 1], [], []>} : vector<16x32xbf16>, vector<32x128xbf16>, vector<16x128xf32> -> vector<16x128xf32>
    %c0_3 = arith.constant 0 : index
    %c0_4 = arith.constant 0 : index
    %3 = vector.load %arg3[%c0_3, %c0_4] : memref<1x512xf32, #tpu.memory_space<vmem>>, vector<1x128xf32>
    %4 = vector.broadcast %3 : vector<1x128xf32> to vector<16x128xf32>
    %5 = arith.addf %2, %4 : vector<16x128xf32>
    %c0_5 = arith.constant 0 : index
    %c128 = arith.constant 128 : index
    %6 = vector.load %arg2[%c0_5, %c128] : memref<32x512xbf16, #tpu.memory_space<vmem>>, vector<32x128xbf16>
    %cst_6 = arith.constant dense<0.000000e+00> : vector<16x128xf32>
    %7 = tpu.matmul %0, %6, %cst_6 {dimension_numbers = #tpu.dot_dimension_numbers<[1], [0], [0], [1], [0, 0, 1, 1], [], []>} : vector<16x32xbf16>, vector<32x128xbf16>, vector<16x128xf32> -> vector<16x128xf32>
    %c0_7 = arith.constant 0 : index
    %c128_8 = arith.constant 128 : index
    %8 = vector.load %arg3[%c0_7, %c128_8] : memref<1x512xf32, #tpu.memory_space<vmem>>, vector<1x128xf32>
    %9 = vector.broadcast %8 : vector<1x128xf32> to vector<16x128xf32>
    %10 = arith.addf %7, %9 : vector<16x128xf32>
    %11 = arith.maximumf %5, %10 : vector<16x128xf32>
    %c0_9 = arith.constant 0 : index
    %c256 = arith.constant 256 : index
    %12 = vector.load %arg2[%c0_9, %c256] : memref<32x512xbf16, #tpu.memory_space<vmem>>, vector<32x128xbf16>
    %cst_10 = arith.constant dense<0.000000e+00> : vector<16x128xf32>
    %13 = tpu.matmul %0, %12, %cst_10 {dimension_numbers = #tpu.dot_dimension_numbers<[1], [0], [0], [1], [0, 0, 1, 1], [], []>} : vector<16x32xbf16>, vector<32x128xbf16>, vector<16x128xf32> -> vector<16x128xf32>
    %c0_11 = arith.constant 0 : index
    %c256_12 = arith.constant 256 : index
    %14 = vector.load %arg3[%c0_11, %c256_12] : memref<1x512xf32, #tpu.memory_space<vmem>>, vector<1x128xf32>
    %15 = vector.broadcast %14 : vector<1x128xf32> to vector<16x128xf32>
    %16 = arith.addf %13, %15 : vector<16x128xf32>
    %17 = arith.maximumf %11, %16 : vector<16x128xf32>
    %c0_13 = arith.constant 0 : index
    %c384 = arith.constant 384 : index
    %18 = vector.load %arg2[%c0_13, %c384] : memref<32x512xbf16, #tpu.memory_space<vmem>>, vector<32x128xbf16>
    %cst_14 = arith.constant dense<0.000000e+00> : vector<16x128xf32>
    %19 = tpu.matmul %0, %18, %cst_14 {dimension_numbers = #tpu.dot_dimension_numbers<[1], [0], [0], [1], [0, 0, 1, 1], [], []>} : vector<16x32xbf16>, vector<32x128xbf16>, vector<16x128xf32> -> vector<16x128xf32>
    %c0_15 = arith.constant 0 : index
    %c384_16 = arith.constant 384 : index
    %20 = vector.load %arg3[%c0_15, %c384_16] : memref<1x512xf32, #tpu.memory_space<vmem>>, vector<1x128xf32>
    %21 = vector.broadcast %20 : vector<1x128xf32> to vector<16x128xf32>
    %22 = arith.addf %19, %21 : vector<16x128xf32>
    %23 = arith.maximumf %17, %22 : vector<16x128xf32>
    %c0_17 = arith.constant 0 : index
    %c0_18 = arith.constant 0 : index
    %24 = vector.load %arg4[%c0_17, %c0_18] : memref<16x128xf32, #tpu.memory_space<vmem>>, vector<16x128xf32>
    tpu.vector_store %arg4[%c0_17, %c0_18], %23 {strides = array<i32>} : memref<16x128xf32, #tpu.memory_space<vmem>>, vector<16x128xf32>,
    return
  }
  func.func @transform_0(%arg0: i32) -> (i32, i32) {
    %c0_i32 = arith.constant 0 : i32
    %c0_i32_0 = arith.constant 0 : i32
    return %arg0, %c0_i32 : i32, i32
  }
  func.func @transform_1(%arg0: i32) -> (i32, i32) {
    %c0_i32 = arith.constant 0 : i32
    %c0_i32_0 = arith.constant 0 : i32
    %c0_i32_1 = arith.constant 0 : i32
    return %c0_i32, %c0_i32_0 : i32, i32
  }
  func.func @transform_2(%arg0: i32) -> (i32, i32) {
    %c0_i32 = arith.constant 0 : i32
    %c0_i32_0 = arith.constant 0 : i32
    %c0_i32_1 = arith.constant 0 : i32
    return %c0_i32, %c0_i32_0 : i32, i32
  }
  func.func @transform_3(%arg0: i32) -> (i32, i32) {
    %c0_i32 = arith.constant 0 : i32
    %c0_i32_0 = arith.constant 0 : i32
    return %arg0, %c0_i32 : i32, i32
  }
}

</mosaic_0001>

<llo_original>
// kernel: tpu_custom_call.1
$region0: #{tpu_custom_call.1}
  #allocation0 [shape = 'u32[]', space=smem, size = 0x4, offset = 0x4, fixed_abs, tag = 'smem constant byte address 0x4 - core index']
  #allocation1 [shape = 'u32[144,128]{1,0:T(1,128)}', space=vmem, size = 0x12000, scoped, tag = 'internal scratch']
  %s0 = inlined_call_operand.hbm [shape: bf16[16,32], index: 0, kind: input, shape index: {}]
  %s1 = inlined_call_operand.hbm [shape: bf16[32,512], index: 1, kind: input, shape index: {}]
  %s2 = inlined_call_operand.hbm [shape: f32[1,512], index: 2, kind: input, shape index: {}]
  %s3 = inlined_call_operand.hbm [shape: f32[16,128], index: 3, kind: output, shape index: {}]
  %s4 = sld [smem:[#allocation0]]
  $region34: #{tpu_custom_call.1} parent=0
    _
  %s6 = ssub.s32 1, %s4
  %s7 = scalar_select 0, %s6, %s4
  $region1: #{tpu_custom_call.1} parent=0
    #allocation2 [shape = 'u8[4096]{0}', space=vmem, size = 0x1000, scoped, tag = 'input window, operand 0, single buffered']
    #allocation3 [shape = 's32[1]{0}', space=sflag, size = 0x4, scoped, tag = 'scoped memory for tpu_custom_call.1']
    #allocation4 [shape = 's32[1]{0}', space=sflag, size = 0x4, scoped, tag = 'scoped memory for tpu_custom_call.1']
    #allocation5 [shape = 'u8[32768]{0}', space=vmem, size = 0x8000, scoped, tag = 'input window, operand 1, single buffered']
    #allocation6 [shape = 's32[1]{0}', space=sflag, size = 0x4, scoped, tag = 'scoped memory for tpu_custom_call.1']
    #allocation7 [shape = 'u8[2048]{0}', space=vmem, size = 0x800, scoped, tag = 'input window, operand 2, single buffered']
    #allocation8 [shape = 'u8[8192]{0}', space=vmem, size = 0x2000, scoped, tag = 'output window, operand 0, single buffered']
    %8 = vsyncpa [#allocation3], 0
    %9 = vsyncpa [#allocation6], 0
    %10 = vsyncpa [#allocation4], 0
    // Predicated region
    $region2: #{tpu_custom_call.1} parent=1 // pred_check
      _
    $region3: #{tpu_custom_call.1} parent=1 // pred_check_branch
      %12 = sbr.rel (0) target = $region5
    $region4: #{tpu_custom_call.1} parent=1 // pred_region
      %s14 = ssub.s32 128, 128
      %15 = vsyncadd [#allocation3], %s14
      %s16 = sshll.u32 [#allocation2], 4
      %s17 = int_to_ptr.vmem [resolvable:$true] %s16
      %22 = dma.hbm_to_vmem [thread:$0]  %s0, 128, %s17, [#allocation3], 64, 64, 4
    $region5: #{tpu_custom_call.1} parent=1 // pred_fallthru
      _
    // Predicated region
    $region6: #{tpu_custom_call.1} parent=1 // pred_check
      _
    $region7: #{tpu_custom_call.1} parent=1 // pred_check_branch
      %24 = sbr.rel (0) target = $region9
    $region8: #{tpu_custom_call.1} parent=1 // pred_region
      %s26 = ssub.s32 1024, 1024
      %27 = vsyncadd [#allocation6], %s26
      %s28 = sshll.u32 [#allocation5], 4
      %s29 = int_to_ptr.vmem [resolvable:$true] %s28
      %34 = dma.hbm_to_vmem [thread:$0]  %s1, 1024, %s29, [#allocation6], 256, 256, 16
    $region9: #{tpu_custom_call.1} parent=1 // pred_fallthru
      _
    // Predicated region
    $region10: #{tpu_custom_call.1} parent=1 // pred_check
      _
    $region11: #{tpu_custom_call.1} parent=1 // pred_check_branch
      %36 = sbr.rel (0) target = $region13
    $region12: #{tpu_custom_call.1} parent=1 // pred_region
      %s38 = ssub.s32 64, 64
      %39 = vsyncadd [#allocation6], %s38
      %s41 = sshll.u32 [#allocation7], 4
      %s42 = int_to_ptr.vmem [resolvable:$true] %s41
      %44 = dma.hbm_to_vmem [thread:$0]  %s2, 64, %s42, [#allocation6]
    $region13: #{tpu_custom_call.1} parent=1 // pred_fallthru
      _
    // Predicated region
    $region14: #{tpu_custom_call.1} parent=1 // pred_check
      _
    $region15: #{tpu_custom_call.1} parent=1 // pred_check_branch
      %46 = sbr.rel (0) target = $region17
    $region16: #{tpu_custom_call.1} parent=1 // pred_region
      %47 = dma.done [#allocation3], 128
    $region17: #{tpu_custom_call.1} parent=1 // pred_fallthru
      _
    // Predicated region
    $region18: #{tpu_custom_call.1} parent=1 // pred_check
      _
    $region19: #{tpu_custom_call.1} parent=1 // pred_check_branch
      %49 = sbr.rel (0) target = $region21
    $region20: #{tpu_custom_call.1} parent=1 // pred_region
      %50 = dma.done [#allocation6], 1024
    $region21: #{tpu_custom_call.1} parent=1 // pred_fallthru
      _
    // Predicated region
    $region22: #{tpu_custom_call.1} parent=1 // pred_check
      _
    $region23: #{tpu_custom_call.1} parent=1 // pred_check_branch
      %52 = sbr.rel (0) target = $region25
    $region24: #{tpu_custom_call.1} parent=1 // pred_region
      %53 = dma.done [#allocation6], 64
    $region25: #{tpu_custom_call.1} parent=1 // pred_fallthru
      _
    %v55 = vld [vmem:[#allocation2] sm:$0xf]
    %v56 = vld [vmem:[#allocation2 + $0x4] sm:$0xf]
    %v57 = vld [vmem:[#allocation5] sm:$0xf]
    %v58 = vld [vmem:[#allocation5 + $0x10] sm:$0xf]
    %v59 = vld [vmem:[#allocation5 + $0x20] sm:$0xf]
    %v60 = vld [vmem:[#allocation5 + $0x30] sm:$0xf]
    %v61 = vld [vmem:[#allocation7] sm:$0x1]
    %v63 = vlaneseq
    %v64 = vshrl.u32 %v63, 7
    %v65 = vsub.s32 0, %v64
    %v66 = vrot.slane %v61, %v65
    %v70 = vunpack.c.l.b16 %v55
    %v71 = vunpack.c.l.b16 %v56
    %v72 = vpack.c.b16 %v71, %v70
    %v77 = vunpack.c.l.b16 %v57
    %v78 = vunpack.c.l.b16 %v58
    %v79 = vunpack.c.l.b16 %v59
    %v80 = vunpack.c.l.b16 %v60
    %v81 = vpack.c.b16 %v78, %v77
    %v82 = vpack.c.b16 %v80, %v79
    %vm85 = vcmask 261120
    %v87 = vsel %vm85, %v72, 0
    %89 = vmatprep.subr.bf16.mxu0 0
    %90 = vmatpush1.bf16.msra.mxu0 0
    %91 = vmatprep.subr.bf16.mxu0 0
    %92 = vmatpush1.bf16.msra.mxu0 0
    %93 = vmatprep.subr.bf16.mxu0 0
    %94 = vmatpush1.bf16.msra.mxu0 0
    %95 = vmatprep.subr.bf16.mxu0 0
    %96 = vmatpush1.bf16.msra.mxu0 0
    %97 = vmatprep.subr.bf16.mxu0 0
    %98 = vmatpush1.bf16.msra.mxu0 0
    %99 = vmatprep.subr.bf16.mxu0 0
    %100 = vmatpush1.bf16.msra.mxu0 0
    %101 = vmatprep.subr.bf16.mxu0 0
    %102 = vmatpush1.bf16.msra.mxu0 %v82
    %103 = vmatprep.subr.bf16.mxu0 0
    %104 = vmatpush1.bf16.msra.mxu0 %v81
    %105 = vmatprep.subr.bf16.mxu0 0
    %106 = vmatpush2.bf16.msra.mxu0 0
    %107 = vmatprep.subr.bf16.mxu0 0
    %108 = vmatpush2.bf16.msra.mxu0 0
    %109 = vmatprep.subr.bf16.mxu0 0
    %110 = vmatpush2.bf16.msra.mxu0 0
    %111 = vmatprep.subr.bf16.mxu0 0
    %112 = vmatpush2.bf16.msra.mxu0 0
    %113 = vmatprep.subr.bf16.mxu0 0
    %114 = vmatpush2.bf16.msra.mxu0 0
    %115 = vmatprep.subr.bf16.mxu0 0
    %116 = vmatpush2.bf16.msra.mxu0 0
    %117 = vmatprep.subr.bf16.mxu0 0
    %118 = vmatpush2.bf16.msra.mxu0 0
    %119 = vmatprep.subr.bf16.mxu0 0
    %120 = vmatpush2.bf16.msra.mxu0 0
    %121 = vmatprep.mubr.bf16.mxu0 0
    %122 = vmatmul.mubr.bf16.gmra.mxu0 %v87
    %v123 = vpop.f32.mrf.mxu0
    %v124 = vadd.f32 %v66, %v123
    %v125 = vpop.f32.mrf.mxu0
    %v126 = vpop.f32.mrf.mxu0
    %v127 = vadd.f32 %v66, %v126
    %v128 = vpop.f32.mrf.mxu0
    %129 = vdwg.mxu0
    %v130 = vld [vmem:[#allocation5 + $0x4] sm:$0xf]
    %v131 = vld [vmem:[#allocation5 + $0x14] sm:$0xf]
    %v132 = vld [vmem:[#allocation5 + $0x24] sm:$0xf]
    %v133 = vld [vmem:[#allocation5 + $0x34] sm:$0xf]
    %v134 = vld [vmem:[#allocation7 + $0x1] sm:$0x1]
    %v136 = vlaneseq
    %v137 = vshrl.u32 %v136, 7
    %v138 = vsub.s32 0, %v137
    %v139 = vrot.slane %v134, %v138
    %v145 = vunpack.c.l.b16 %v130
    %v146 = vunpack.c.l.b16 %v131
    %v147 = vunpack.c.l.b16 %v132
    %v148 = vunpack.c.l.b16 %v133
    %v149 = vpack.c.b16 %v146, %v145
    %v150 = vpack.c.b16 %v148, %v147
    %153 = vmatprep.subr.bf16.mxu0 0
    %154 = vmatpush1.bf16.msra.mxu0 0
    %155 = vmatprep.subr.bf16.mxu0 0
    %156 = vmatpush1.bf16.msra.mxu0 0
    %157 = vmatprep.subr.bf16.mxu0 0
    %158 = vmatpush1.bf16.msra.mxu0 0
    %159 = vmatprep.subr.bf16.mxu0 0
    %160 = vmatpush1.bf16.msra.mxu0 0
    %161 = vmatprep.subr.bf16.mxu0 0
    %162 = vmatpush1.bf16.msra.mxu0 0
    %163 = vmatprep.subr.bf16.mxu0 0
    %164 = vmatpush1.bf16.msra.mxu0 0
    %165 = vmatprep.subr.bf16.mxu0 0
    %166 = vmatpush1.bf16.msra.mxu0 %v150
    %167 = vmatprep.subr.bf16.mxu0 0
    %168 = vmatpush1.bf16.msra.mxu0 %v149
    %169 = vmatprep.subr.bf16.mxu0 0
    %170 = vmatpush2.bf16.msra.mxu0 0
    %171 = vmatprep.subr.bf16.mxu0 0
    %172 = vmatpush2.bf16.msra.mxu0 0
    %173 = vmatprep.subr.bf16.mxu0 0
    %174 = vmatpush2.bf16.msra.mxu0 0
    %175 = vmatprep.subr.bf16.mxu0 0
    %176 = vmatpush2.bf16.msra.mxu0 0
    %177 = vmatprep.subr.bf16.mxu0 0
    %178 = vmatpush2.bf16.msra.mxu0 0
    %179 = vmatprep.subr.bf16.mxu0 0
    %180 = vmatpush2.bf16.msra.mxu0 0
    %181 = vmatprep.subr.bf16.mxu0 0
    %182 = vmatpush2.bf16.msra.mxu0 0
    %183 = vmatprep.subr.bf16.mxu0 0
    %184 = vmatpush2.bf16.msra.mxu0 0
    %185 = vmatprep.mubr.bf16.mxu0 0
    %186 = vmatmul.mubr.bf16.gmra.mxu0 %v87
    %v187 = vpop.f32.mrf.mxu0
    %v188 = vadd.f32 %v139, %v187
    %v189 = vpop.f32.mrf.mxu0
    %v190 = vpop.f32.mrf.mxu0
    %v191 = vadd.f32 %v139, %v190
    %v192 = vpop.f32.mrf.mxu0
    %193 = vdwg.mxu0
    %v194 = vmax.f32 %v124, %v188
    %v195 = vmax.f32 %v127, %v191
    %v196 = vld [vmem:[#allocation5 + $0x8] sm:$0xf]
    %v197 = vld [vmem:[#allocation5 + $0x18] sm:$0xf]
    %v198 = vld [vmem:[#allocation5 + $0x28] sm:$0xf]
    %v199 = vld [vmem:[#allocation5 + $0x38] sm:$0xf]
    %v200 = vld [vmem:[#allocation7 + $0x2] sm:$0x1]
    %v202 = vlaneseq
    %v203 = vshrl.u32 %v202, 7
    %v204 = vsub.s32 0, %v203
    %v205 = vrot.slane %v200, %v204
    %v211 = vunpack.c.l.b16 %v196
    %v212 = vunpack.c.l.b16 %v197
    %v213 = vunpack.c.l.b16 %v198
    %v214 = vunpack.c.l.b16 %v199
    %v215 = vpack.c.b16 %v212, %v211
    %v216 = vpack.c.b16 %v214, %v213
    %219 = vmatprep.subr.bf16.mxu0 0
    %220 = vmatpush1.bf16.msra.mxu0 0
    %221 = vmatprep.subr.bf16.mxu0 0
    %222 = vmatpush1.bf16.msra.mxu0 0
    %223 = vmatprep.subr.bf16.mxu0 0
    %224 = vmatpush1.bf16.msra.mxu0 0
    %225 = vmatprep.subr.bf16.mxu0 0
    %226 = vmatpush1.bf16.msra.mxu0 0
    %227 = vmatprep.subr.bf16.mxu0 0
    %228 = vmatpush1.bf16.msra.mxu0 0
    %229 = vmatprep.subr.bf16.mxu0 0
    %230 = vmatpush1.bf16.msra.mxu0 0
    %231 = vmatprep.subr.bf16.mxu0 0
    %232 = vmatpush1.bf16.msra.mxu0 %v216
    %233 = vmatprep.subr.bf16.mxu0 0
    %234 = vmatpush1.bf16.msra.mxu0 %v215
    %235 = vmatprep.subr.bf16.mxu0 0
    %236 = vmatpush2.bf16.msra.mxu0 0
    %237 = vmatprep.subr.bf16.mxu0 0
    %238 = vmatpush2.bf16.msra.mxu0 0
    %239 = vmatprep.subr.bf16.mxu0 0
    %240 = vmatpush2.bf16.msra.mxu0 0
    %241 = vmatprep.subr.bf16.mxu0 0
    %242 = vmatpush2.bf16.msra.mxu0 0
    %243 = vmatprep.subr.bf16.mxu0 0
    %244 = vmatpush2.bf16.msra.mxu0 0
    %245 = vmatprep.subr.bf16.mxu0 0
    %246 = vmatpush2.bf16.msra.mxu0 0
    %247 = vmatprep.subr.bf16.mxu0 0
    %248 = vmatpush2.bf16.msra.mxu0 0
    %249 = vmatprep.subr.bf16.mxu0 0
    %250 = vmatpush2.bf16.msra.mxu0 0
    %251 = vmatprep.mubr.bf16.mxu0 0
    %252 = vmatmul.mubr.bf16.gmra.mxu0 %v87
    %v253 = vpop.f32.mrf.mxu0
    %v254 = vadd.f32 %v205, %v253
    %v255 = vpop.f32.mrf.mxu0
    %v256 = vpop.f32.mrf.mxu0
    %v257 = vadd.f32 %v205, %v256
    %v258 = vpop.f32.mrf.mxu0
    %259 = vdwg.mxu0
    %v260 = vmax.f32 %v194, %v254
    %v261 = vmax.f32 %v195, %v257
    %v262 = vld [vmem:[#allocation5 + $0xc] sm:$0xf]
    %v263 = vld [vmem:[#allocation5 + $0x1c] sm:$0xf]
    %v264 = vld [vmem:[#allocation5 + $0x2c] sm:$0xf]
    %v265 = vld [vmem:[#allocation5 + $0x3c] sm:$0xf]
    %v266 = vld [vmem:[#allocation7 + $0x3] sm:$0x1]
    %v268 = vlaneseq
    %v269 = vshrl.u32 %v268, 7
    %v270 = vsub.s32 0, %v269
    %v271 = vrot.slane %v266, %v270
    %v277 = vunpack.c.l.b16 %v262
    %v278 = vunpack.c.l.b16 %v263
    %v279 = vunpack.c.l.b16 %v264
    %v280 = vunpack.c.l.b16 %v265
    %v281 = vpack.c.b16 %v278, %v277
    %v282 = vpack.c.b16 %v280, %v279
    %285 = vmatprep.subr.bf16.mxu0 0
    %286 = vmatpush1.bf16.msra.mxu0 0
    %287 = vmatprep.subr.bf16.mxu0 0
    %288 = vmatpush1.bf16.msra.mxu0 0
    %289 = vmatprep.subr.bf16.mxu0 0
    %290 = vmatpush1.bf16.msra.mxu0 0
    %291 = vmatprep.subr.bf16.mxu0 0
    %292 = vmatpush1.bf16.msra.mxu0 0
    %293 = vmatprep.subr.bf16.mxu0 0
    %294 = vmatpush1.bf16.msra.mxu0 0
    %295 = vmatprep.subr.bf16.mxu0 0
    %296 = vmatpush1.bf16.msra.mxu0 0
    %297 = vmatprep.subr.bf16.mxu0 0
    %298 = vmatpush1.bf16.msra.mxu0 %v282
    %299 = vmatprep.subr.bf16.mxu0 0
    %300 = vmatpush1.bf16.msra.mxu0 %v281
    %301 = vmatprep.subr.bf16.mxu0 0
    %302 = vmatpush2.bf16.msra.mxu0 0
    %303 = vmatprep.subr.bf16.mxu0 0
    %304 = vmatpush2.bf16.msra.mxu0 0
    %305 = vmatprep.subr.bf16.mxu0 0
    %306 = vmatpush2.bf16.msra.mxu0 0
    %307 = vmatprep.subr.bf16.mxu0 0
    %308 = vmatpush2.bf16.msra.mxu0 0
    %309 = vmatprep.subr.bf16.mxu0 0
    %310 = vmatpush2.bf16.msra.mxu0 0
    %311 = vmatprep.subr.bf16.mxu0 0
    %312 = vmatpush2.bf16.msra.mxu0 0
    %313 = vmatprep.subr.bf16.mxu0 0
    %314 = vmatpush2.bf16.msra.mxu0 0
    %315 = vmatprep.subr.bf16.mxu0 0
    %316 = vmatpush2.bf16.msra.mxu0 0
    %317 = vmatprep.mubr.bf16.mxu0 0
    %318 = vmatmul.mubr.bf16.gmra.mxu0 %v87
    %v319 = vpop.f32.mrf.mxu0
    %v320 = vadd.f32 %v271, %v319
    %v321 = vpop.f32.mrf.mxu0
    %v322 = vpop.f32.mrf.mxu0
    %v323 = vadd.f32 %v271, %v322
    %v324 = vpop.f32.mrf.mxu0
    %325 = vdwg.mxu0
    %v326 = vmax.f32 %v260, %v320
    %v327 = vmax.f32 %v261, %v323
    %328 = vst [vmem:[#allocation8] sm:$0xff] %v326
    %329 = vst [vmem:[#allocation8 + $0x8] sm:$0xff] %v327
    // Predicated region
    $region26: #{tpu_custom_call.1} parent=1 // pred_check
      _
    $region27: #{tpu_custom_call.1} parent=1 // pred_check_branch
      %331 = sbr.rel (0) target = $region29
    $region28: #{tpu_custom_call.1} parent=1 // pred_region
      %s333 = ssub.s32 256, 256
      %334 = vsyncadd [#allocation4], %s333
      %s335 = sshll.u32 [#allocation8], 4
      %s336 = int_to_ptr.vmem [resolvable:$true] %s335
      %341 = dma.vmem_to_hbm [thread:$0]  %s336, 256, %s3, [#allocation4], 128, 128, 8
    $region29: #{tpu_custom_call.1} parent=1 // pred_fallthru
      _
    // Predicated region
    $region30: #{tpu_custom_call.1} parent=1 // pred_check
      _
    $region31: #{tpu_custom_call.1} parent=1 // pred_check_branch
      %343 = sbr.rel (0) target = $region33
    $region32: #{tpu_custom_call.1} parent=1 // pred_region
      %344 = dma.done [#allocation4], 256
    $region33: #{tpu_custom_call.1} parent=1 // pred_fallthru
      _
    %345 = vsyncpa [#allocation3], 1
    %346 = vsyncpa [#allocation6], 1
    %347 = vsyncpa [#allocation4], 1

</llo_original>
